<compile_context>
chip_gen: v7x
topology: tpu7x:2x2x1
jax: 0.10.0
libtpu: 0.0.40
codegen_flags: <defaults>
</compile_context>

<pallas_src>
import functools

import jax
import jax.numpy as jnp
from jax.experimental import pallas as pl
from jax.experimental.pallas import tpu as pltpu

_LANE = 128
_SUBLANE = 8
# v7x has 2 TensorCores per chip; making the grid length a multiple of this
# balances megacore sharding there and costs at most one tiny extra step on
# single-TC v5e/v6e.
_NUM_TENSORCORES = 2


def _round_up(x, m):
    return ((x + m - 1) // m) * m


def _qnetwork_kernel(x_ref, w1_ref, b1_ref, w2_ref, b2_ref, o_ref):
    # fc1: [B, I] @ [I, H] + [1, H] -> ReLU   (f32 accumulation on the MXU)
    h = jnp.dot(x_ref[...], w1_ref[...], preferred_element_type=jnp.float32)
    h = jnp.maximum(h + b1_ref[...], 0.0)
    # fc2: [B, H] @ [H, O_pad] + [1, O_pad]; O_pad keeps the MXU pass
    # lane-dense, but only the real O columns are stored (o_ref last dim == O),
    # so no padded bytes are written back to HBM.
    out = jnp.dot(h, w2_ref[...], preferred_element_type=jnp.float32)
    out = out + b2_ref[...]
    o = o_ref.shape[-1]
    o_ref[...] = out[:, :o].astype(o_ref.dtype)


@functools.partial(jax.jit, static_argnames=("single_block_rows", "max_block_b"))
def qnetwork_forward(x, w1, b1, w2, b2, *, single_block_rows=2048, max_block_b=4096):
    """relu(x @ w1 + b1) @ w2 + b2.

    Shapes:
      x : [B, input_size]
      w1: [input_size, hidden_size]   b1: [1, hidden_size]
      w2: [hidden_size, output_size]  b2: [1, output_size]
    """
    B, I = x.shape
    H, O = w2.shape
    out_dtype = x.dtype

    # Pad fc2's feature dim to a full lane width (MXU N-dim stays one dense
    # pass). Padded columns are sliced away inside the kernel, never stored.
    O_pad = _round_up(max(O, _LANE), _LANE)
    if O_pad != O:
        w2p = jnp.zeros((H, O_pad), w2.dtype).at[:, :O].set(w2)
        b2p = jnp.zeros((1, O_pad), b2.dtype).at[:, :O].set(b2)
    else:
        w2p, b2p = w2, b2

    cost = pl.CostEstimate(
        flops=2 * B * (I * H + H * O_pad),
        transcendentals=0,
        bytes_accessed=4 * (B * I + I * H + H + H * O_pad + O_pad + B * O),
    )

    if B <= single_block_rows:
        # No grid: single invocation, all operands VMEM-resident (full-array
        # blocks are legal for any B and tiny I/O dims).
        return pl.pallas_call(
            _qnetwork_kernel,
            out_shape=jax.ShapeDtypeStruct((B, O), out_dtype),
            in_specs=[pl.BlockSpec(memory_space=pltpu.MemorySpace.VMEM)] * 5,
            out_specs=pl.BlockSpec(memory_space=pltpu.MemorySpace.VMEM),
            cost_estimate=cost,
        )(x, w1, b1, w2p, b2p)

    # ---- Tiled-batch path (replay-batch / vectorized-env sizes) ----
    # Grid length is a multiple of the TC count so both v7x cores get equal
    # work; TB is a multiple of 8 and capped so per-step VMEM (~TB*2.5 KiB
    # including double buffers) stays under default scoped limits.
    B8 = _round_up(B, _SUBLANE)
    num_steps = _round_up(pl.cdiv(B8, max_block_b), _NUM_TENSORCORES)
    TB = _round_up(pl.cdiv(B8, num_steps), _SUBLANE)
    Bp = TB * num_steps
    xp = x if Bp == B else jnp.pad(x, ((0, Bp - B), (0, 0)))

    out = pl.pallas_call(
        _qnetwork_kernel,
        out_shape=jax.ShapeDtypeStruct((Bp, O), out_dtype),
        grid=(num_steps,),
        in_specs=[
            pl.BlockSpec((TB, I), lambda i: (i, 0)),      # batch tile of x
            # Resident operands (constant index_map -> fetched once).
            # TODO(synk): pl.Buffered(1) pipeline_mode would drop their spare
            # VMEM buffer; negligible at H=32 so omitted for compile safety.
            pl.BlockSpec((I, H), lambda i: (0, 0)),       # w1 resident
            pl.BlockSpec((1, H), lambda i: (0, 0)),       # b1 resident
            pl.BlockSpec((H, O_pad), lambda i: (0, 0)),   # w2 (padded) resident
            pl.BlockSpec((1, O_pad), lambda i: (0, 0)),   # b2 (padded) resident
        ],
        out_specs=pl.BlockSpec((TB, O), lambda i: (i, 0)),  # un-padded output
        compiler_params=pltpu.CompilerParams(
            dimension_semantics=("parallel",),            # megacore sharding on v7x
        ),
        cost_estimate=cost,
    )(xp, w1, b1, w2p, b2p)
    return out[:B] if Bp != B else out


def init_qnetwork_params(key, input_size, hidden_size, output_size):
    """Init mirroring torch.nn.Linear defaults (U(+/- 1/sqrt(fan_in))).

    Weights are returned already transposed to [in, out] layout for the kernel.
    """
    k1, k2, k3, k4 = jax.random.split(key, 4)
    bound1 = 1.0 / jnp.sqrt(jnp.float32(input_size))
    bound2 = 1.0 / jnp.sqrt(jnp.float32(hidden_size))
    w1 = jax.random.uniform(k1, (input_size, hidden_size), jnp.float32,
                            minval=-bound1, maxval=bound1)
    b1 = jax.random.uniform(k2, (1, hidden_size), jnp.float32,
                            minval=-bound1, maxval=bound1)
    w2 = jax.random.uniform(k3, (hidden_size, output_size), jnp.float32,
                            minval=-bound2, maxval=bound2)
    b2 = jax.random.uniform(k4, (1, output_size), jnp.float32,
                            minval=-bound2, maxval=bound2)
    return w1, b1, w2, b2


if __name__ == "__main__":
    # Shapes consistent with a DQN Q-network (CartPole-ish): state=4, actions=2.
    input_size, hidden_size, output_size = 4, 32, 2
    key = jax.random.PRNGKey(0)
    k_x, k_p, k_xl = jax.random.split(key, 3)
    w1, b1, w2, b2 = init_qnetwork_params(k_p, input_size, hidden_size, output_size)

    def reference(x):
        return jnp.maximum(x @ w1 + b1, 0.0) @ w2 + b2

    # 1) Small-batch path (no grid, single VMEM-resident block).
    batch_small = 8
    x_small = jax.random.normal(k_x, (batch_small, input_size), jnp.float32)
    out_small = jax.block_until_ready(qnetwork_forward(x_small, w1, b1, w2, b2))
    assert out_small.shape == (batch_small, output_size)
    assert jnp.allclose(out_small, reference(x_small), atol=1e-5, rtol=1e-5)

    # 2) Tiled-batch path: non-multiple-of-8 batch exercises the padding +
    #    balanced grid + un-padded (masked-store) output writeback.
    batch_large = 1030
    x_large = jax.random.normal(k_xl, (batch_large, input_size), jnp.float32)
    out_large = jax.block_until_ready(
        qnetwork_forward(x_large, w1, b1, w2, b2,
                         single_block_rows=256, max_block_b=512))
    assert out_large.shape == (batch_large, output_size)
    assert jnp.allclose(out_large, reference(x_large), atol=1e-5, rtol=1e-5)

    print("KERNEL_OK")
</pallas_src>

<mosaic_0001>
module attributes {stable_mosaic.version = 11 : i64} {
  func.func @_qnetwork_kernel(%arg0: memref<8x4xf32, #tpu.memory_space<vmem>>, %arg1: memref<4x32xf32, #tpu.memory_space<vmem>>, %arg2: memref<1x32xf32, #tpu.memory_space<vmem>>, %arg3: memref<32x128xf32, #tpu.memory_space<vmem>>, %arg4: memref<1x128xf32, #tpu.memory_space<vmem>>, %arg5: memref<8x2xf32, #tpu.memory_space<vmem>>) attributes {dimension_semantics = [], scalar_prefetch = 0 : i64, scratch_operands = 0 : i64, tpu.core_type = #tpu.core_type<tc>} {
    %c0 = arith.constant 0 : index
    %c0_0 = arith.constant 0 : index
    %0 = vector.load %arg0[%c0, %c0_0] : memref<8x4xf32, #tpu.memory_space<vmem>>, vector<8x4xf32>
    %c0_1 = arith.constant 0 : index
    %c0_2 = arith.constant 0 : index
    %1 = vector.load %arg1[%c0_1, %c0_2] : memref<4x32xf32, #tpu.memory_space<vmem>>, vector<4x32xf32>
    %cst = arith.constant dense<0.000000e+00> : vector<8x32xf32>
    %2 = tpu.matmul %0, %1, %cst {dimension_numbers = #tpu.dot_dimension_numbers<[1], [0], [0], [1], [0, 0, 1, 1], [], []>} : vector<8x4xf32>, vector<4x32xf32>, vector<8x32xf32> -> vector<8x32xf32>
    %c0_3 = arith.constant 0 : index
    %c0_4 = arith.constant 0 : index
    %3 = vector.load %arg2[%c0_3, %c0_4] : memref<1x32xf32, #tpu.memory_space<vmem>>, vector<1x32xf32>
    %4 = vector.broadcast %3 : vector<1x32xf32> to vector<8x32xf32>
    %5 = arith.addf %2, %4 : vector<8x32xf32>
    %cst_5 = arith.constant 0.000000e+00 : f32
    %6 = vector.broadcast %cst_5 : f32 to vector<8x32xf32>
    %7 = arith.maximumf %5, %6 : vector<8x32xf32>
    %c0_6 = arith.constant 0 : index
    %c0_7 = arith.constant 0 : index
    %8 = vector.load %arg3[%c0_6, %c0_7] : memref<32x128xf32, #tpu.memory_space<vmem>>, vector<32x128xf32>
    %cst_8 = arith.constant dense<0.000000e+00> : vector<8x128xf32>
    %9 = tpu.matmul %7, %8, %cst_8 {dimension_numbers = #tpu.dot_dimension_numbers<[1], [0], [0], [1], [0, 0, 1, 1], [], []>} : vector<8x32xf32>, vector<32x128xf32>, vector<8x128xf32> -> vector<8x128xf32>
    %c0_9 = arith.constant 0 : index
    %c0_10 = arith.constant 0 : index
    %10 = vector.load %arg4[%c0_9, %c0_10] : memref<1x128xf32, #tpu.memory_space<vmem>>, vector<1x128xf32>
    %11 = vector.broadcast %10 : vector<1x128xf32> to vector<8x128xf32>
    %12 = arith.addf %9, %11 : vector<8x128xf32>
    %13 = vector.extract_strided_slice %12 {offsets = [0, 0], sizes = [8, 2], strides = [1, 1]} : vector<8x128xf32> to vector<8x2xf32>
    %c0_11 = arith.constant 0 : index
    %c0_12 = arith.constant 0 : index
    %14 = vector.load %arg5[%c0_11, %c0_12] : memref<8x2xf32, #tpu.memory_space<vmem>>, vector<8x2xf32>
    tpu.vector_store %arg5[%c0_11, %c0_12], %13 {strides = array<i32>} : memref<8x2xf32, #tpu.memory_space<vmem>>, vector<8x2xf32>,
    return
  }
}

</mosaic_0001>

<llo_original>
// kernel: qnetwork_forward.1
$region0: #{qnetwork_forward.1}
  #allocation0 [shape = 'u32[]', space=smem, size = 0x4, offset = 0x4, fixed_abs, tag = 'smem constant byte address 0x4 - core index']
  #allocation1 [shape = 'u32[144,128]{1,0:T(1,128)}', space=vmem, size = 0x12000, scoped, tag = 'internal scratch']
  %s0 = inlined_call_operand.vmem [shape: f32[8,4], index: 0, kind: input, shape index: {}]
  %s1 = inlined_call_operand.vmem [shape: f32[4,32], index: 1, kind: input, shape index: {}]
  %s2 = inlined_call_operand.vmem [shape: f32[1,32], index: 2, kind: input, shape index: {}]
  %s3 = inlined_call_operand.vmem [shape: f32[32,128], index: 3, kind: input, shape index: {}]
  %s4 = inlined_call_operand.vmem [shape: f32[1,128], index: 4, kind: input, shape index: {}]
  %s5 = inlined_call_operand.vmem [shape: f32[8,2], index: 5, kind: output, shape index: {}]
  %s6 = sld [smem:[#allocation0]]
  $region30: #{qnetwork_forward.1} parent=0
    _
  %s8 = ssub.s32 1, %s6
  %s9 = scalar_select 0, %s8, %s6
  // Predicated region
  $region2: #{qnetwork_forward.1} parent=0 // pred_check
    _
  $region3: #{qnetwork_forward.1} parent=0 // pred_check_branch
    %11 = sbr.rel (0) target = $region5
  $region4: #{qnetwork_forward.1} parent=0 // pred_region
    _
  $region5: #{qnetwork_forward.1} parent=0 // pred_fallthru
    _
  // Predicated region
  $region6: #{qnetwork_forward.1} parent=0 // pred_check
    _
  $region7: #{qnetwork_forward.1} parent=0 // pred_check_branch
    %13 = sbr.rel (0) target = $region9
  $region8: #{qnetwork_forward.1} parent=0 // pred_region
    _
  $region9: #{qnetwork_forward.1} parent=0 // pred_fallthru
    _
  // Predicated region
  $region10: #{qnetwork_forward.1} parent=0 // pred_check
    _
  $region11: #{qnetwork_forward.1} parent=0 // pred_check_branch
    %15 = sbr.rel (0) target = $region13
  $region12: #{qnetwork_forward.1} parent=0 // pred_region
    _
  $region13: #{qnetwork_forward.1} parent=0 // pred_fallthru
    _
  // Predicated region
  $region14: #{qnetwork_forward.1} parent=0 // pred_check
    _
  $region15: #{qnetwork_forward.1} parent=0 // pred_check_branch
    %17 = sbr.rel (0) target = $region17
  $region16: #{qnetwork_forward.1} parent=0 // pred_region
    _
  $region17: #{qnetwork_forward.1} parent=0 // pred_fallthru
    _
  // Predicated region
  $region18: #{qnetwork_forward.1} parent=0 // pred_check
    _
  $region19: #{qnetwork_forward.1} parent=0 // pred_check_branch
    %19 = sbr.rel (0) target = $region21
  $region20: #{qnetwork_forward.1} parent=0 // pred_region
    _
  $region21: #{qnetwork_forward.1} parent=0 // pred_fallthru
    _
  %v20 = vld [vmem:[%s0] sm:$0xff]
  %v21 = vld [vmem:[%s1] sm:$0xf]
  %v22 = vld [vmem:[%s2] sm:$0x1]
  %v24 = vlaneseq
  %v25 = vshrl.u32 %v24, 7
  %v26 = vsub.s32 0, %v25
  %v27 = vrot.slane %v22, %v26
  %vm29 = vcmask 31744
  %v31 = vsel %vm29, %v20, 0
  %vm33 = vcmask 1043456
  %v35 = vsel %vm33, %v21, 0
  %37 = vmatprep.subr.mxu0 0.0
  %38 = vmatpush1.msra.mxu0 %v35
  %39 = vmatprep.subr.mxu0 0.0
  %40 = vmatpush1.msra.mxu0 0.0
  %41 = vmatprep.subr.mxu0 0.0
  %42 = vmatpush1.msra.mxu0 0.0
  %43 = vmatprep.subr.mxu0 0.0
  %44 = vmatpush1.msra.mxu0 0.0
  %45 = vmatprep.subr.mxu0 0.0
  %46 = vmatpush1.msra.mxu0 0.0
  %47 = vmatprep.subr.mxu0 0.0
  %48 = vmatpush1.msra.mxu0 0.0
  %49 = vmatprep.subr.mxu0 0.0
  %50 = vmatpush1.msra.mxu0 0.0
  %51 = vmatprep.subr.mxu0 0.0
  %52 = vmatpush1.msra.mxu0 0.0
  %53 = vmatprep.subr.mxu0 0.0
  %54 = vmatpush1.msra.mxu0 0.0
  %55 = vmatprep.subr.mxu0 0.0
  %56 = vmatpush1.msra.mxu0 0.0
  %57 = vmatprep.subr.mxu0 0.0
  %58 = vmatpush1.msra.mxu0 0.0
  %59 = vmatprep.subr.mxu0 0.0
  %60 = vmatpush1.msra.mxu0 0.0
  %61 = vmatprep.subr.mxu0 0.0
  %62 = vmatpush1.msra.mxu0 0.0
  %63 = vmatprep.subr.mxu0 0.0
  %64 = vmatpush1.msra.mxu0 0.0
  %65 = vmatprep.subr.mxu0 0.0
  %66 = vmatpush1.msra.mxu0 0.0
  %67 = vmatprep.subr.mxu0 0.0
  %68 = vmatpush1.msra.mxu0 0.0
  %69 = vmatprep.subr.mxu0 0.0
  %70 = vmatpush1.msra.mxu0 0.0
  %71 = vmatprep.subr.mxu0 0.0
  %72 = vmatpush1.msra.mxu0 0.0
  %73 = vmatprep.subr.mxu0 0.0
  %74 = vmatpush1.msra.mxu0 0.0
  %75 = vmatprep.subr.mxu0 0.0
  %76 = vmatpush1.msra.mxu0 0.0
  %77 = vmatprep.subr.mxu0 0.0
  %78 = vmatpush1.msra.mxu0 0.0
  %79 = vmatprep.subr.mxu0 0.0
  %80 = vmatpush1.msra.mxu0 0.0
  %81 = vmatprep.subr.mxu0 0.0
  %82 = vmatpush1.msra.mxu0 0.0
  %83 = vmatprep.subr.mxu0 0.0
  %84 = vmatpush1.msra.mxu0 0.0
  %85 = vmatprep.subr.mxu0 0.0
  %86 = vmatpush1.msra.mxu0 0.0
  %87 = vmatprep.subr.mxu0 0.0
  %88 = vmatpush1.msra.mxu0 0.0
  %89 = vmatprep.subr.mxu0 0.0
  %90 = vmatpush1.msra.mxu0 0.0
  %91 = vmatprep.subr.mxu0 0.0
  %92 = vmatpush1.msra.mxu0 0.0
  %93 = vmatprep.subr.mxu0 0.0
  %94 = vmatpush1.msra.mxu0 0.0
  %95 = vmatprep.subr.mxu0 0.0
  %96 = vmatpush1.msra.mxu0 0.0
  %97 = vmatprep.subr.mxu0 0.0
  %98 = vmatpush1.msra.mxu0 0.0
  %99 = vmatprep.subr.mxu0 0.0
  %100 = vmatpush1.msra.mxu0 0.0
  %101 = vmatprep.mubr.f32.mxu0 0.0
  %102 = vmatmul.mubr.f32.gmra.mrb[0].mxu0 %v31
  %v103 = vpop.f32.mrb[0].mxu0
  %v104 = vadd.f32 %v27, %v103
  %v105 = vpop.f32.mrb[0].mxu0
  %106 = vdwg.mxu0
  %v107 = vmax.f32 %v104, 0.0
  %v108 = vld [vmem:[%s3] sm:$0xff]
  %v109 = vld [vmem:[%s3 + $0x8] sm:$0xff]
  %v110 = vld [vmem:[%s3 + $0x10] sm:$0xff]
  %v111 = vld [vmem:[%s3 + $0x18] sm:$0xff]
  %v112 = vld [vmem:[%s4] sm:$0x1]
  %v114 = vlaneseq
  %v115 = vshrl.u32 %v114, 7
  %v116 = vsub.s32 0, %v115
  %v117 = vrot.slane %v112, %v116
  %vm119 = vcmask 261120
  %v121 = vsel %vm119, %v107, 0
  %123 = vmatprep.subr.mxu0 0.0
  %124 = vmatpush1.msra.mxu0 %v108
  %125 = vmatprep.subr.mxu0 0.0
  %126 = vmatpush1.msra.mxu0 %v109
  %127 = vmatprep.subr.mxu0 0.0
  %128 = vmatpush1.msra.mxu0 %v110
  %129 = vmatprep.subr.mxu0 0.0
  %130 = vmatpush1.msra.mxu0 %v111
  %131 = vmatprep.subr.mxu0 0.0
  %132 = vmatpush1.msra.mxu0 0.0
  %133 = vmatprep.subr.mxu0 0.0
  %134 = vmatpush1.msra.mxu0 0.0
  %135 = vmatprep.subr.mxu0 0.0
  %136 = vmatpush1.msra.mxu0 0.0
  %137 = vmatprep.subr.mxu0 0.0
  %138 = vmatpush1.msra.mxu0 0.0
  %139 = vmatprep.subr.mxu0 0.0
  %140 = vmatpush1.msra.mxu0 0.0
  %141 = vmatprep.subr.mxu0 0.0
  %142 = vmatpush1.msra.mxu0 0.0
  %143 = vmatprep.subr.mxu0 0.0
  %144 = vmatpush1.msra.mxu0 0.0
  %145 = vmatprep.subr.mxu0 0.0
  %146 = vmatpush1.msra.mxu0 0.0
  %147 = vmatprep.subr.mxu0 0.0
  %148 = vmatpush1.msra.mxu0 0.0
  %149 = vmatprep.subr.mxu0 0.0
  %150 = vmatpush1.msra.mxu0 0.0
  %151 = vmatprep.subr.mxu0 0.0
  %152 = vmatpush1.msra.mxu0 0.0
  %153 = vmatprep.subr.mxu0 0.0
  %154 = vmatpush1.msra.mxu0 0.0
  %155 = vmatprep.subr.mxu0 0.0
  %156 = vmatpush1.msra.mxu0 0.0
  %157 = vmatprep.subr.mxu0 0.0
  %158 = vmatpush1.msra.mxu0 0.0
  %159 = vmatprep.subr.mxu0 0.0
  %160 = vmatpush1.msra.mxu0 0.0
  %161 = vmatprep.subr.mxu0 0.0
  %162 = vmatpush1.msra.mxu0 0.0
  %163 = vmatprep.subr.mxu0 0.0
  %164 = vmatpush1.msra.mxu0 0.0
  %165 = vmatprep.subr.mxu0 0.0
  %166 = vmatpush1.msra.mxu0 0.0
  %167 = vmatprep.subr.mxu0 0.0
  %168 = vmatpush1.msra.mxu0 0.0
  %169 = vmatprep.subr.mxu0 0.0
  %170 = vmatpush1.msra.mxu0 0.0
  %171 = vmatprep.subr.mxu0 0.0
  %172 = vmatpush1.msra.mxu0 0.0
  %173 = vmatprep.subr.mxu0 0.0
  %174 = vmatpush1.msra.mxu0 0.0
  %175 = vmatprep.subr.mxu0 0.0
  %176 = vmatpush1.msra.mxu0 0.0
  %177 = vmatprep.subr.mxu0 0.0
  %178 = vmatpush1.msra.mxu0 0.0
  %179 = vmatprep.subr.mxu0 0.0
  %180 = vmatpush1.msra.mxu0 0.0
  %181 = vmatprep.subr.mxu0 0.0
  %182 = vmatpush1.msra.mxu0 0.0
  %183 = vmatprep.subr.mxu0 0.0
  %184 = vmatpush1.msra.mxu0 0.0
  %185 = vmatprep.subr.mxu0 0.0
  %186 = vmatpush1.msra.mxu0 0.0
  %187 = vmatprep.mubr.f32.mxu0 0.0
  %188 = vmatmul.mubr.f32.gmra.mrb[0].mxu0 %v121
  %v189 = vpop.f32.mrb[0].mxu0
  %v190 = vadd.f32 %v117, %v189
  %v191 = vpop.f32.mrb[0].mxu0
  %192 = vdwg.mxu0
  %vm193 = vcmask 15360
  %194 = vst.msk [vmem:[%s5] sm:$0xff] %vm193, %v190
  // Predicated region
  $region22: #{qnetwork_forward.1} parent=0 // pred_check
    _
  $region23: #{qnetwork_forward.1} parent=0 // pred_check_branch
    %196 = sbr.rel (0) target = $region25
  $region24: #{qnetwork_forward.1} parent=0 // pred_region
    _
  $region25: #{qnetwork_forward.1} parent=0 // pred_fallthru
    _
  // Predicated region
  $region26: #{qnetwork_forward.1} parent=0 // pred_check
    _
  $region27: #{qnetwork_forward.1} parent=0 // pred_check_branch
    %198 = sbr.rel (0) target = $region29
  $region28: #{qnetwork_forward.1} parent=0 // pred_region
    _
  $region29: #{qnetwork_forward.1} parent=0 // pred_fallthru
    _

</llo_original>
